<compile_context>
chip_gen: v7x
topology: tpu7x:2x2x1
jax: 0.10.0
libtpu: 0.0.40
codegen_flags: <defaults>
</compile_context>

<pallas_src>
import functools

import jax
import jax.numpy as jnp
from jax.experimental import pallas as pl
from jax.experimental.pallas import tpu as pltpu


def _round_up(x, m):
    return ((x + m - 1) // m) * m


def _grad_loss_kernel(pred_ref, targ_ref, mask_ref, out_ref, *, scales):
    """All scales fused.

    pred/targ/mask: (B, Hp, Wp) VMEM tiles (zero padded; mask == 0 in padding).
    out: (scales, 2) float32 in SMEM; out[s] = (sum(grad_x + grad_y), sum(mask_sub)).
    """
    pred = pred_ref[...].astype(jnp.float32)
    targ = targ_ref[...].astype(jnp.float32)
    mask = mask_ref[...].astype(jnp.float32)

    B, H, W = pred.shape

    # Masked difference, computed once at full resolution (pointwise, so its
    # value at any strided position equals the per-scale subsampled diff).
    diff = mask * (pred - targ)

    # Index grids built once and reused by every scale (hoisted broadcasts).
    row = jax.lax.broadcasted_iota(jnp.int32, (B, H, W), 1)
    col = jax.lax.broadcasted_iota(jnp.int32, (B, H, W), 2)

    for s in range(scales):
        step = 1 << s  # power of two

        # "this pixel exists in the ::step subsampled image"
        on_row = (row & (step - 1)) == 0
        on_col = (col & (step - 1)) == 0
        sel = jnp.logical_and(on_row, on_col)

        # Neighbour at +step via XLU rolls (no misaligned slices).
        shift_x = (-step) % W
        shift_y = (-step) % H
        diff_x = pltpu.roll(diff, shift_x, axis=2)  # [..., w] -> diff[..., (w+step) % W]
        mask_x = pltpu.roll(mask, shift_x, axis=2)
        diff_y = pltpu.roll(diff, shift_y, axis=1)  # [:, h, :] -> diff[:, (h+step) % H, :]
        mask_y = pltpu.roll(mask, shift_y, axis=1)

        # Both endpoints of the finite difference must lie inside the
        # (sub)image: this also discards the cyclic wrap-around of roll.
        valid_x = jnp.logical_and(sel, (col + step) < W)
        valid_y = jnp.logical_and(sel, (row + step) < H)

        gx = jnp.abs(diff_x - diff) * (mask * mask_x)
        gy = jnp.abs(diff_y - diff) * (mask * mask_y)

        contrib = jnp.where(valid_x, gx, 0.0) + jnp.where(valid_y, gy, 0.0)
        out_ref[s, 0] = jnp.sum(contrib)                      # numerator
        out_ref[s, 1] = jnp.sum(jnp.where(sel, mask, 0.0))    # divisor (sum of subsampled mask)


@functools.partial(jax.jit, static_argnames=("scales",))
def gradient_loss(prediction, target, mask, *, scales=4):
    """Equivalent of GradientLoss(scales=scales, reduction_type='batch').forward."""
    assert scales >= 1
    B, H, W = prediction.shape
    Hp = _round_up(H, 8)
    Wp = _round_up(W, 128)   # lane-dense last dim

    maskf = mask.astype(prediction.dtype)
    pad = ((0, 0), (0, Hp - H), (0, Wp - W))
    pred_p = jnp.pad(prediction, pad)
    targ_p = jnp.pad(target, pad)
    mask_p = jnp.pad(maskf, pad)   # zero-padded mask => padded pixels contribute nothing

    bytes_in = 3 * B * Hp * Wp * pred_p.dtype.itemsize
    cost = pl.CostEstimate(
        flops=scales * 14 * B * Hp * Wp,
        transcendentals=0,
        bytes_accessed=bytes_in + scales * 2 * 4,
    )

    out = pl.pallas_call(
        functools.partial(_grad_loss_kernel, scales=scales),
        out_shape=jax.ShapeDtypeStruct((scales, 2), jnp.float32),
        in_specs=[
            pl.BlockSpec(memory_space=pltpu.MemorySpace.VMEM),
            pl.BlockSpec(memory_space=pltpu.MemorySpace.VMEM),
            pl.BlockSpec(memory_space=pltpu.MemorySpace.VMEM),
        ],
        out_specs=pl.BlockSpec(memory_space=pltpu.MemorySpace.SMEM),
        cost_estimate=cost,
    )(pred_p, targ_p, mask_p)

    num = out[:, 0]
    den = out[:, 1]
    # masked_reduction(reduction_type="batch"): 0 if mask empty else sum/divisor
    per_scale = jnp.where(den > 0.0, num / jnp.maximum(den, 1.0), 0.0)
    return jnp.sum(per_scale)


def _reference_gradient_loss(prediction, target, mask, *, scales=4):
    """Pure-JAX reference mirroring the PyTorch module exactly."""
    pred = prediction.astype(jnp.float32)
    targ = target.astype(jnp.float32)
    maskf = mask.astype(jnp.float32)
    total = jnp.zeros((), jnp.float32)
    for scale in range(scales):
        step = 2 ** scale
        p, t, m = pred[:, ::step, ::step], targ[:, ::step, ::step], maskf[:, ::step, ::step]
        diff = m * (p - t)
        gx = jnp.abs(diff[:, :, 1:] - diff[:, :, :-1]) * (m[:, :, 1:] * m[:, :, :-1])
        gy = jnp.abs(diff[:, 1:, :] - diff[:, :-1, :]) * (m[:, 1:, :] * m[:, :-1, :])
        num = jnp.sum(gx) + jnp.sum(gy)
        den = jnp.sum(m)
        total = total + jnp.where(den > 0.0, num / den, 0.0)
    return total


if __name__ == "__main__":
    # Shapes consistent with the module's 'Float[Tensor, "1 32 mult"]' annotation.
    B, H, W = 1, 32, 64
    key = jax.random.PRNGKey(0)
    k1, k2, k3 = jax.random.split(key, 3)

    prediction = jax.random.normal(k1, (B, H, W), dtype=jnp.float32)
    target = jax.random.normal(k2, (B, H, W), dtype=jnp.float32)
    mask = jax.random.bernoulli(k3, p=0.8, shape=(B, H, W))  # bool mask of valid pixels

    loss = gradient_loss(prediction, target, mask, scales=4)
    loss = jax.block_until_ready(loss)

    ref = _reference_gradient_loss(prediction, target, mask, scales=4)
    assert jnp.allclose(loss, ref, rtol=1e-4, atol=1e-5), (loss, ref)

    print("KERNEL_OK")
</pallas_src>

<mosaic_0001>
module attributes {stable_mosaic.version = 11 : i64} {
  func.func @_grad_loss_kernel(%arg0: memref<1x32x128xf32, #tpu.memory_space<vmem>>, %arg1: memref<1x32x128xf32, #tpu.memory_space<vmem>>, %arg2: memref<1x32x128xf32, #tpu.memory_space<vmem>>, %arg3: memref<4x2xf32, #tpu.memory_space<smem>>) attributes {dimension_semantics = [], scalar_prefetch = 0 : i64, scratch_operands = 0 : i64, tpu.core_type = #tpu.core_type<tc>} {
    %c0 = arith.constant 0 : index
    %c0_0 = arith.constant 0 : index
    %c0_1 = arith.constant 0 : index
    %0 = vector.load %arg0[%c0, %c0_0, %c0_1] : memref<1x32x128xf32, #tpu.memory_space<vmem>>, vector<1x32x128xf32>
    %c0_2 = arith.constant 0 : index
    %c0_3 = arith.constant 0 : index
    %c0_4 = arith.constant 0 : index
    %1 = vector.load %arg1[%c0_2, %c0_3, %c0_4] : memref<1x32x128xf32, #tpu.memory_space<vmem>>, vector<1x32x128xf32>
    %c0_5 = arith.constant 0 : index
    %c0_6 = arith.constant 0 : index
    %c0_7 = arith.constant 0 : index
    %2 = vector.load %arg2[%c0_5, %c0_6, %c0_7] : memref<1x32x128xf32, #tpu.memory_space<vmem>>, vector<1x32x128xf32>
    %3 = arith.subf %0, %1 : vector<1x32x128xf32>
    %4 = arith.mulf %2, %3 : vector<1x32x128xf32>
    %5 = tpu.iota {dimensions = array<i32: 1>} : vector<1x32x128xi32>
    %6 = tpu.iota {dimensions = array<i32: 2>} : vector<1x32x128xi32>
    %c0_i32 = arith.constant 0 : i32
    %7 = vector.broadcast %c0_i32 : i32 to vector<1x32x128xi32>
    %8 = arith.andi %5, %7 : vector<1x32x128xi32>
    %c0_i32_8 = arith.constant 0 : i32
    %9 = vector.broadcast %c0_i32_8 : i32 to vector<1x32x128xi32>
    %10 = arith.cmpi eq, %8, %9 : vector<1x32x128xi32>
    %c0_i32_9 = arith.constant 0 : i32
    %11 = vector.broadcast %c0_i32_9 : i32 to vector<1x32x128xi32>
    %12 = arith.andi %6, %11 : vector<1x32x128xi32>
    %c0_i32_10 = arith.constant 0 : i32
    %13 = vector.broadcast %c0_i32_10 : i32 to vector<1x32x128xi32>
    %14 = arith.cmpi eq, %12, %13 : vector<1x32x128xi32>
    %15 = arith.andi %10, %14 : vector<1x32x128xi1>
    %c127_i32 = arith.constant 127 : i32
    %16 = tpu.dynamic_rotate %4 by %c127_i32 dim 2 : vector<1x32x128xf32>, i32 -> vector<1x32x128xf32>
    %c127_i32_11 = arith.constant 127 : i32
    %17 = tpu.dynamic_rotate %2 by %c127_i32_11 dim 2 : vector<1x32x128xf32>, i32 -> vector<1x32x128xf32>
    %c31_i32 = arith.constant 31 : i32
    %18 = tpu.dynamic_rotate %4 by %c31_i32 dim 1 : vector<1x32x128xf32>, i32 -> vector<1x32x128xf32>
    %c31_i32_12 = arith.constant 31 : i32
    %19 = tpu.dynamic_rotate %2 by %c31_i32_12 dim 1 : vector<1x32x128xf32>, i32 -> vector<1x32x128xf32>
    %c1_i32 = arith.constant 1 : i32
    %20 = vector.broadcast %c1_i32 : i32 to vector<1x32x128xi32>
    %21 = arith.addi %6, %20 : vector<1x32x128xi32>
    %c128_i32 = arith.constant 128 : i32
    %22 = vector.broadcast %c128_i32 : i32 to vector<1x32x128xi32>
    %23 = arith.cmpi slt, %21, %22 : vector<1x32x128xi32>
    %24 = arith.andi %15, %23 : vector<1x32x128xi1>
    %c1_i32_13 = arith.constant 1 : i32
    %25 = vector.broadcast %c1_i32_13 : i32 to vector<1x32x128xi32>
    %26 = arith.addi %5, %25 : vector<1x32x128xi32>
    %c32_i32 = arith.constant 32 : i32
    %27 = vector.broadcast %c32_i32 : i32 to vector<1x32x128xi32>
    %28 = arith.cmpi slt, %26, %27 : vector<1x32x128xi32>
    %29 = arith.andi %15, %28 : vector<1x32x128xi1>
    %30 = arith.subf %16, %4 : vector<1x32x128xf32>
    %31 = math.absf %30 : vector<1x32x128xf32>
    %32 = arith.mulf %2, %17 : vector<1x32x128xf32>
    %33 = arith.mulf %31, %32 : vector<1x32x128xf32>
    %34 = arith.subf %18, %4 : vector<1x32x128xf32>
    %35 = math.absf %34 : vector<1x32x128xf32>
    %36 = arith.mulf %2, %19 : vector<1x32x128xf32>
    %37 = arith.mulf %35, %36 : vector<1x32x128xf32>
    %cst = arith.constant 0.000000e+00 : f32
    %38 = vector.broadcast %cst : f32 to vector<1x32x128xf32>
    %39 = arith.select %24, %33, %38 : vector<1x32x128xi1>, vector<1x32x128xf32>
    %cst_14 = arith.constant 0.000000e+00 : f32
    %40 = vector.broadcast %cst_14 : f32 to vector<1x32x128xf32>
    %41 = arith.select %29, %37, %40 : vector<1x32x128xi1>, vector<1x32x128xf32>
    %42 = arith.addf %39, %41 : vector<1x32x128xf32>
    %43 = vector.shape_cast %42 : vector<1x32x128xf32> to vector<1x1x32x128xf32>
    %cst_15 = arith.constant dense<0.000000e+00> : vector<1xf32>
    %44 = vector.multi_reduction <add>, %43, %cst_15 [1, 2, 3] : vector<1x1x32x128xf32> to vector<1xf32>
    %45 = vector.shape_cast %44 : vector<1xf32> to vector<1x1x1x1xf32>
    %46 = vector.extract %45[0, 0, 0, 0] : f32 from vector<1x1x1x1xf32>
    %c0_16 = arith.constant 0 : index
    %c0_17 = arith.constant 0 : index
    %47 = memref.load %arg3[%c0_16, %c0_17] : memref<4x2xf32, #tpu.memory_space<smem>>
    memref.store %46, %arg3[%c0_16, %c0_17] : memref<4x2xf32, #tpu.memory_space<smem>>
    %cst_18 = arith.constant 0.000000e+00 : f32
    %48 = vector.broadcast %cst_18 : f32 to vector<1x32x128xf32>
    %49 = arith.select %15, %2, %48 : vector<1x32x128xi1>, vector<1x32x128xf32>
    %50 = vector.shape_cast %49 : vector<1x32x128xf32> to vector<1x1x32x128xf32>
    %cst_19 = arith.constant dense<0.000000e+00> : vector<1xf32>
    %51 = vector.multi_reduction <add>, %50, %cst_19 [1, 2, 3] : vector<1x1x32x128xf32> to vector<1xf32>
    %52 = vector.shape_cast %51 : vector<1xf32> to vector<1x1x1x1xf32>
    %53 = vector.extract %52[0, 0, 0, 0] : f32 from vector<1x1x1x1xf32>
    %c0_20 = arith.constant 0 : index
    %c1 = arith.constant 1 : index
    %54 = memref.load %arg3[%c0_20, %c1] : memref<4x2xf32, #tpu.memory_space<smem>>
    memref.store %53, %arg3[%c0_20, %c1] : memref<4x2xf32, #tpu.memory_space<smem>>
    %c1_i32_21 = arith.constant 1 : i32
    %55 = vector.broadcast %c1_i32_21 : i32 to vector<1x32x128xi32>
    %56 = arith.andi %5, %55 : vector<1x32x128xi32>
    %c0_i32_22 = arith.constant 0 : i32
    %57 = vector.broadcast %c0_i32_22 : i32 to vector<1x32x128xi32>
    %58 = arith.cmpi eq, %56, %57 : vector<1x32x128xi32>
    %c1_i32_23 = arith.constant 1 : i32
    %59 = vector.broadcast %c1_i32_23 : i32 to vector<1x32x128xi32>
    %60 = arith.andi %6, %59 : vector<1x32x128xi32>
    %c0_i32_24 = arith.constant 0 : i32
    %61 = vector.broadcast %c0_i32_24 : i32 to vector<1x32x128xi32>
    %62 = arith.cmpi eq, %60, %61 : vector<1x32x128xi32>
    %63 = arith.andi %58, %62 : vector<1x32x128xi1>
    %c126_i32 = arith.constant 126 : i32
    %64 = tpu.dynamic_rotate %4 by %c126_i32 dim 2 : vector<1x32x128xf32>, i32 -> vector<1x32x128xf32>
    %c126_i32_25 = arith.constant 126 : i32
    %65 = tpu.dynamic_rotate %2 by %c126_i32_25 dim 2 : vector<1x32x128xf32>, i32 -> vector<1x32x128xf32>
    %c30_i32 = arith.constant 30 : i32
    %66 = tpu.dynamic_rotate %4 by %c30_i32 dim 1 : vector<1x32x128xf32>, i32 -> vector<1x32x128xf32>
    %c30_i32_26 = arith.constant 30 : i32
    %67 = tpu.dynamic_rotate %2 by %c30_i32_26 dim 1 : vector<1x32x128xf32>, i32 -> vector<1x32x128xf32>
    %c2_i32 = arith.constant 2 : i32
    %68 = vector.broadcast %c2_i32 : i32 to vector<1x32x128xi32>
    %69 = arith.addi %6, %68 : vector<1x32x128xi32>
    %c128_i32_27 = arith.constant 128 : i32
    %70 = vector.broadcast %c128_i32_27 : i32 to vector<1x32x128xi32>
    %71 = arith.cmpi slt, %69, %70 : vector<1x32x128xi32>
    %72 = arith.andi %63, %71 : vector<1x32x128xi1>
    %c2_i32_28 = arith.constant 2 : i32
    %73 = vector.broadcast %c2_i32_28 : i32 to vector<1x32x128xi32>
    %74 = arith.addi %5, %73 : vector<1x32x128xi32>
    %c32_i32_29 = arith.constant 32 : i32
    %75 = vector.broadcast %c32_i32_29 : i32 to vector<1x32x128xi32>
    %76 = arith.cmpi slt, %74, %75 : vector<1x32x128xi32>
    %77 = arith.andi %63, %76 : vector<1x32x128xi1>
    %78 = arith.subf %64, %4 : vector<1x32x128xf32>
    %79 = math.absf %78 : vector<1x32x128xf32>
    %80 = arith.mulf %2, %65 : vector<1x32x128xf32>
    %81 = arith.mulf %79, %80 : vector<1x32x128xf32>
    %82 = arith.subf %66, %4 : vector<1x32x128xf32>
    %83 = math.absf %82 : vector<1x32x128xf32>
    %84 = arith.mulf %2, %67 : vector<1x32x128xf32>
    %85 = arith.mulf %83, %84 : vector<1x32x128xf32>
    %cst_30 = arith.constant 0.000000e+00 : f32
    %86 = vector.broadcast %cst_30 : f32 to vector<1x32x128xf32>
    %87 = arith.select %72, %81, %86 : vector<1x32x128xi1>, vector<1x32x128xf32>
    %cst_31 = arith.constant 0.000000e+00 : f32
    %88 = vector.broadcast %cst_31 : f32 to vector<1x32x128xf32>
    %89 = arith.select %77, %85, %88 : vector<1x32x128xi1>, vector<1x32x128xf32>
    %90 = arith.addf %87, %89 : vector<1x32x128xf32>
    %91 = vector.shape_cast %90 : vector<1x32x128xf32> to vector<1x1x32x128xf32>
    %cst_32 = arith.constant dense<0.000000e+00> : vector<1xf32>
    %92 = vector.multi_reduction <add>, %91, %cst_32 [1, 2, 3] : vector<1x1x32x128xf32> to vector<1xf32>
    %93 = vector.shape_cast %92 : vector<1xf32> to vector<1x1x1x1xf32>
    %94 = vector.extract %93[0, 0, 0, 0] : f32 from vector<1x1x1x1xf32>
    %c1_33 = arith.constant 1 : index
    %c0_34 = arith.constant 0 : index
    %95 = memref.load %arg3[%c1_33, %c0_34] : memref<4x2xf32, #tpu.memory_space<smem>>
    memref.store %94, %arg3[%c1_33, %c0_34] : memref<4x2xf32, #tpu.memory_space<smem>>
    %cst_35 = arith.constant 0.000000e+00 : f32
    %96 = vector.broadcast %cst_35 : f32 to vector<1x32x128xf32>
    %97 = arith.select %63, %2, %96 : vector<1x32x128xi1>, vector<1x32x128xf32>
    %98 = vector.shape_cast %97 : vector<1x32x128xf32> to vector<1x1x32x128xf32>
    %cst_36 = arith.constant dense<0.000000e+00> : vector<1xf32>
    %99 = vector.multi_reduction <add>, %98, %cst_36 [1, 2, 3] : vector<1x1x32x128xf32> to vector<1xf32>
    %100 = vector.shape_cast %99 : vector<1xf32> to vector<1x1x1x1xf32>
    %101 = vector.extract %100[0, 0, 0, 0] : f32 from vector<1x1x1x1xf32>
    %c1_37 = arith.constant 1 : index
    %c1_38 = arith.constant 1 : index
    %102 = memref.load %arg3[%c1_37, %c1_38] : memref<4x2xf32, #tpu.memory_space<smem>>
    memref.store %101, %arg3[%c1_37, %c1_38] : memref<4x2xf32, #tpu.memory_space<smem>>
    %c3_i32 = arith.constant 3 : i32
    %103 = vector.broadcast %c3_i32 : i32 to vector<1x32x128xi32>
    %104 = arith.andi %5, %103 : vector<1x32x128xi32>
    %c0_i32_39 = arith.constant 0 : i32
    %105 = vector.broadcast %c0_i32_39 : i32 to vector<1x32x128xi32>
    %106 = arith.cmpi eq, %104, %105 : vector<1x32x128xi32>
    %c3_i32_40 = arith.constant 3 : i32
    %107 = vector.broadcast %c3_i32_40 : i32 to vector<1x32x128xi32>
    %108 = arith.andi %6, %107 : vector<1x32x128xi32>
    %c0_i32_41 = arith.constant 0 : i32
    %109 = vector.broadcast %c0_i32_41 : i32 to vector<1x32x128xi32>
    %110 = arith.cmpi eq, %108, %109 : vector<1x32x128xi32>
    %111 = arith.andi %106, %110 : vector<1x32x128xi1>
    %c124_i32 = arith.constant 124 : i32
    %112 = tpu.dynamic_rotate %4 by %c124_i32 dim 2 : vector<1x32x128xf32>, i32 -> vector<1x32x128xf32>
    %c124_i32_42 = arith.constant 124 : i32
    %113 = tpu.dynamic_rotate %2 by %c124_i32_42 dim 2 : vector<1x32x128xf32>, i32 -> vector<1x32x128xf32>
    %c28_i32 = arith.constant 28 : i32
    %114 = tpu.dynamic_rotate %4 by %c28_i32 dim 1 : vector<1x32x128xf32>, i32 -> vector<1x32x128xf32>
    %c28_i32_43 = arith.constant 28 : i32
    %115 = tpu.dynamic_rotate %2 by %c28_i32_43 dim 1 : vector<1x32x128xf32>, i32 -> vector<1x32x128xf32>
    %c4_i32 = arith.constant 4 : i32
    %116 = vector.broadcast %c4_i32 : i32 to vector<1x32x128xi32>
    %117 = arith.addi %6, %116 : vector<1x32x128xi32>
    %c128_i32_44 = arith.constant 128 : i32
    %118 = vector.broadcast %c128_i32_44 : i32 to vector<1x32x128xi32>
    %119 = arith.cmpi slt, %117, %118 : vector<1x32x128xi32>
    %120 = arith.andi %111, %119 : vector<1x32x128xi1>
    %c4_i32_45 = arith.constant 4 : i32
    %121 = vector.broadcast %c4_i32_45 : i32 to vector<1x32x128xi32>
    %122 = arith.addi %5, %121 : vector<1x32x128xi32>
    %c32_i32_46 = arith.constant 32 : i32
    %123 = vector.broadcast %c32_i32_46 : i32 to vector<1x32x128xi32>
    %124 = arith.cmpi slt, %122, %123 : vector<1x32x128xi32>
    %125 = arith.andi %111, %124 : vector<1x32x128xi1>
    %126 = arith.subf %112, %4 : vector<1x32x128xf32>
    %127 = math.absf %126 : vector<1x32x128xf32>
    %128 = arith.mulf %2, %113 : vector<1x32x128xf32>
    %129 = arith.mulf %127, %128 : vector<1x32x128xf32>
    %130 = arith.subf %114, %4 : vector<1x32x128xf32>
    %131 = math.absf %130 : vector<1x32x128xf32>
    %132 = arith.mulf %2, %115 : vector<1x32x128xf32>
    %133 = arith.mulf %131, %132 : vector<1x32x128xf32>
    %cst_47 = arith.constant 0.000000e+00 : f32
    %134 = vector.broadcast %cst_47 : f32 to vector<1x32x128xf32>
    %135 = arith.select %120, %129, %134 : vector<1x32x128xi1>, vector<1x32x128xf32>
    %cst_48 = arith.constant 0.000000e+00 : f32
    %136 = vector.broadcast %cst_48 : f32 to vector<1x32x128xf32>
    %137 = arith.select %125, %133, %136 : vector<1x32x128xi1>, vector<1x32x128xf32>
    %138 = arith.addf %135, %137 : vector<1x32x128xf32>
    %139 = vector.shape_cast %138 : vector<1x32x128xf32> to vector<1x1x32x128xf32>
    %cst_49 = arith.constant dense<0.000000e+00> : vector<1xf32>
    %140 = vector.multi_reduction <add>, %139, %cst_49 [1, 2, 3] : vector<1x1x32x128xf32> to vector<1xf32>
    %141 = vector.shape_cast %140 : vector<1xf32> to vector<1x1x1x1xf32>
    %142 = vector.extract %141[0, 0, 0, 0] : f32 from vector<1x1x1x1xf32>
    %c2 = arith.constant 2 : index
    %c0_50 = arith.constant 0 : index
    %143 = memref.load %arg3[%c2, %c0_50] : memref<4x2xf32, #tpu.memory_space<smem>>
    memref.store %142, %arg3[%c2, %c0_50] : memref<4x2xf32, #tpu.memory_space<smem>>
    %cst_51 = arith.constant 0.000000e+00 : f32
    %144 = vector.broadcast %cst_51 : f32 to vector<1x32x128xf32>
    %145 = arith.select %111, %2, %144 : vector<1x32x128xi1>, vector<1x32x128xf32>
    %146 = vector.shape_cast %145 : vector<1x32x128xf32> to vector<1x1x32x128xf32>
    %cst_52 = arith.constant dense<0.000000e+00> : vector<1xf32>
    %147 = vector.multi_reduction <add>, %146, %cst_52 [1, 2, 3] : vector<1x1x32x128xf32> to vector<1xf32>
    %148 = vector.shape_cast %147 : vector<1xf32> to vector<1x1x1x1xf32>
    %149 = vector.extract %148[0, 0, 0, 0] : f32 from vector<1x1x1x1xf32>
    %c2_53 = arith.constant 2 : index
    %c1_54 = arith.constant 1 : index
    %150 = memref.load %arg3[%c2_53, %c1_54] : memref<4x2xf32, #tpu.memory_space<smem>>
    memref.store %149, %arg3[%c2_53, %c1_54] : memref<4x2xf32, #tpu.memory_space<smem>>
    %c7_i32 = arith.constant 7 : i32
    %151 = vector.broadcast %c7_i32 : i32 to vector<1x32x128xi32>
    %152 = arith.andi %5, %151 : vector<1x32x128xi32>
    %c0_i32_55 = arith.constant 0 : i32
    %153 = vector.broadcast %c0_i32_55 : i32 to vector<1x32x128xi32>
    %154 = arith.cmpi eq, %152, %153 : vector<1x32x128xi32>
    %c7_i32_56 = arith.constant 7 : i32
    %155 = vector.broadcast %c7_i32_56 : i32 to vector<1x32x128xi32>
    %156 = arith.andi %6, %155 : vector<1x32x128xi32>
    %c0_i32_57 = arith.constant 0 : i32
    %157 = vector.broadcast %c0_i32_57 : i32 to vector<1x32x128xi32>
    %158 = arith.cmpi eq, %156, %157 : vector<1x32x128xi32>
    %159 = arith.andi %154, %158 : vector<1x32x128xi1>
    %c120_i32 = arith.constant 120 : i32
    %160 = tpu.dynamic_rotate %4 by %c120_i32 dim 2 : vector<1x32x128xf32>, i32 -> vector<1x32x128xf32>
    %c120_i32_58 = arith.constant 120 : i32
    %161 = tpu.dynamic_rotate %2 by %c120_i32_58 dim 2 : vector<1x32x128xf32>, i32 -> vector<1x32x128xf32>
    %c24_i32 = arith.constant 24 : i32
    %162 = tpu.dynamic_rotate %4 by %c24_i32 dim 1 : vector<1x32x128xf32>, i32 -> vector<1x32x128xf32>
    %c24_i32_59 = arith.constant 24 : i32
    %163 = tpu.dynamic_rotate %2 by %c24_i32_59 dim 1 : vector<1x32x128xf32>, i32 -> vector<1x32x128xf32>
    %c8_i32 = arith.constant 8 : i32
    %164 = vector.broadcast %c8_i32 : i32 to vector<1x32x128xi32>
    %165 = arith.addi %6, %164 : vector<1x32x128xi32>
    %c128_i32_60 = arith.constant 128 : i32
    %166 = vector.broadcast %c128_i32_60 : i32 to vector<1x32x128xi32>
    %167 = arith.cmpi slt, %165, %166 : vector<1x32x128xi32>
    %168 = arith.andi %159, %167 : vector<1x32x128xi1>
    %c8_i32_61 = arith.constant 8 : i32
    %169 = vector.broadcast %c8_i32_61 : i32 to vector<1x32x128xi32>
    %170 = arith.addi %5, %169 : vector<1x32x128xi32>
    %c32_i32_62 = arith.constant 32 : i32
    %171 = vector.broadcast %c32_i32_62 : i32 to vector<1x32x128xi32>
    %172 = arith.cmpi slt, %170, %171 : vector<1x32x128xi32>
    %173 = arith.andi %159, %172 : vector<1x32x128xi1>
    %174 = arith.subf %160, %4 : vector<1x32x128xf32>
    %175 = math.absf %174 : vector<1x32x128xf32>
    %176 = arith.mulf %2, %161 : vector<1x32x128xf32>
    %177 = arith.mulf %175, %176 : vector<1x32x128xf32>
    %178 = arith.subf %162, %4 : vector<1x32x128xf32>
    %179 = math.absf %178 : vector<1x32x128xf32>
    %180 = arith.mulf %2, %163 : vector<1x32x128xf32>
    %181 = arith.mulf %179, %180 : vector<1x32x128xf32>
    %cst_63 = arith.constant 0.000000e+00 : f32
    %182 = vector.broadcast %cst_63 : f32 to vector<1x32x128xf32>
    %183 = arith.select %168, %177, %182 : vector<1x32x128xi1>, vector<1x32x128xf32>
    %cst_64 = arith.constant 0.000000e+00 : f32
    %184 = vector.broadcast %cst_64 : f32 to vector<1x32x128xf32>
    %185 = arith.select %173, %181, %184 : vector<1x32x128xi1>, vector<1x32x128xf32>
    %186 = arith.addf %183, %185 : vector<1x32x128xf32>
    %187 = vector.shape_cast %186 : vector<1x32x128xf32> to vector<1x1x32x128xf32>
    %cst_65 = arith.constant dense<0.000000e+00> : vector<1xf32>
    %188 = vector.multi_reduction <add>, %187, %cst_65 [1, 2, 3] : vector<1x1x32x128xf32> to vector<1xf32>
    %189 = vector.shape_cast %188 : vector<1xf32> to vector<1x1x1x1xf32>
    %190 = vector.extract %189[0, 0, 0, 0] : f32 from vector<1x1x1x1xf32>
    %c3 = arith.constant 3 : index
    %c0_66 = arith.constant 0 : index
    %191 = memref.load %arg3[%c3, %c0_66] : memref<4x2xf32, #tpu.memory_space<smem>>
    memref.store %190, %arg3[%c3, %c0_66] : memref<4x2xf32, #tpu.memory_space<smem>>
    %cst_67 = arith.constant 0.000000e+00 : f32
    %192 = vector.broadcast %cst_67 : f32 to vector<1x32x128xf32>
    %193 = arith.select %159, %2, %192 : vector<1x32x128xi1>, vector<1x32x128xf32>
    %194 = vector.shape_cast %193 : vector<1x32x128xf32> to vector<1x1x32x128xf32>
    %cst_68 = arith.constant dense<0.000000e+00> : vector<1xf32>
    %195 = vector.multi_reduction <add>, %194, %cst_68 [1, 2, 3] : vector<1x1x32x128xf32> to vector<1xf32>
    %196 = vector.shape_cast %195 : vector<1xf32> to vector<1x1x1x1xf32>
    %197 = vector.extract %196[0, 0, 0, 0] : f32 from vector<1x1x1x1xf32>
    %c3_69 = arith.constant 3 : index
    %c1_70 = arith.constant 1 : index
    %198 = memref.load %arg3[%c3_69, %c1_70] : memref<4x2xf32, #tpu.memory_space<smem>>
    memref.store %197, %arg3[%c3_69, %c1_70] : memref<4x2xf32, #tpu.memory_space<smem>>
    return
  }
}

</mosaic_0001>

<llo_original>
// kernel: gradient_loss.1
$region0: #{gradient_loss.1}
  #allocation0 [shape = 'u32[]', space=smem, size = 0x4, offset = 0x4, fixed_abs, tag = 'smem constant byte address 0x4 - core index']
  #allocation1 [shape = 'u32[144,128]{1,0:T(1,128)}', space=vmem, size = 0x12000, scoped, tag = 'internal scratch']
  %s0 = inlined_call_operand.vmem [shape: f32[1,32,128], index: 0, kind: input, shape index: {}]
  %s1 = inlined_call_operand.vmem [shape: f32[1,32,128], index: 1, kind: input, shape index: {}]
  %s2 = inlined_call_operand.vmem [shape: f32[1,32,128], index: 2, kind: input, shape index: {}]
  %s3 = inlined_call_operand.vmem [shape: f32[4,2], index: 3, kind: output, shape index: {}]
  %s4 = sld [smem:[#allocation0]]
  $region22: #{gradient_loss.1} parent=0
    _
  %s6 = ssub.s32 1, %s4
  %s7 = scalar_select 0, %s6, %s4
  $region1: #{gradient_loss.1} parent=0
    #allocation2 [shape = 'u8[2048]{0}', space=smem, size = 0x800, scoped, tag = 'output window, operand 0, single buffered']
    #allocation3 [shape = 's32[1]{0}', space=sflag, size = 0x4, scoped, tag = 'scoped memory for gradient_loss.1']
    %8 = vsyncpa [#allocation3], 0
    // Predicated region
    $region2: #{gradient_loss.1} parent=1 // pred_check
      _
    $region3: #{gradient_loss.1} parent=1 // pred_check_branch
      %10 = sbr.rel (0) target = $region5
    $region4: #{gradient_loss.1} parent=1 // pred_region
      _
    $region5: #{gradient_loss.1} parent=1 // pred_fallthru
      _
    // Predicated region
    $region6: #{gradient_loss.1} parent=1 // pred_check
      _
    $region7: #{gradient_loss.1} parent=1 // pred_check_branch
      %12 = sbr.rel (0) target = $region9
    $region8: #{gradient_loss.1} parent=1 // pred_region
      _
    $region9: #{gradient_loss.1} parent=1 // pred_fallthru
      _
    // Predicated region
    $region10: #{gradient_loss.1} parent=1 // pred_check
      _
    $region11: #{gradient_loss.1} parent=1 // pred_check_branch
      %14 = sbr.rel (0) target = $region13
    $region12: #{gradient_loss.1} parent=1 // pred_region
      _
    $region13: #{gradient_loss.1} parent=1 // pred_fallthru
      _
    %v15 = vld [vmem:[%s0] sm:$0xff]
    %v16 = vld [vmem:[%s0 + $0x8] sm:$0xff]
    %v17 = vld [vmem:[%s0 + $0x10] sm:$0xff]
    %v18 = vld [vmem:[%s0 + $0x18] sm:$0xff]
    %v19 = vld [vmem:[%s1] sm:$0xff]
    %v20 = vld [vmem:[%s1 + $0x8] sm:$0xff]
    %v21 = vld [vmem:[%s1 + $0x10] sm:$0xff]
    %v22 = vld [vmem:[%s1 + $0x18] sm:$0xff]
    %v23 = vld [vmem:[%s2] sm:$0xff]
    %v24 = vld [vmem:[%s2 + $0x8] sm:$0xff]
    %v25 = vld [vmem:[%s2 + $0x10] sm:$0xff]
    %v26 = vld [vmem:[%s2 + $0x18] sm:$0xff]
    %v27 = vsub.f32 %v15, %v19
    %v28 = vsub.f32 %v16, %v20
    %v29 = vsub.f32 %v17, %v21
    %v30 = vsub.f32 %v18, %v22
    %v31 = vmul.f32 %v23, %v27
    %v32 = vmul.f32 %v24, %v28
    %v33 = vmul.f32 %v25, %v29
    %v34 = vmul.f32 %v26, %v30
    %v35 = vlaneseq
    %v36 = vshrl.u32 %v35, 7
    %v37 = vadd.s32 %v36, 8
    %v38 = vadd.s32 %v36, 16
    %v39 = vadd.s32 %v36, 24
    %v40 = vlaneseq
    %v41 = vand.u32 %v40, 127
    %42 = vrot.lane.b32.xlu0 %v31, 127
    %v43 = vpop.permute.xlu0 %42
    %44 = vrot.lane.b32.xlu0 %v32, 127
    %v45 = vpop.permute.xlu0 %44
    %46 = vrot.lane.b32.xlu0 %v33, 127
    %v47 = vpop.permute.xlu0 %46
    %48 = vrot.lane.b32.xlu0 %v34, 127
    %v49 = vpop.permute.xlu0 %48
    %50 = vrot.lane.b32.xlu0 %v23, 127
    %v51 = vpop.permute.xlu0 %50
    %52 = vrot.lane.b32.xlu0 %v24, 127
    %v53 = vpop.permute.xlu0 %52
    %54 = vrot.lane.b32.xlu0 %v25, 127
    %v55 = vpop.permute.xlu0 %54
    %56 = vrot.lane.b32.xlu0 %v26, 127
    %v57 = vpop.permute.xlu0 %56
    %v58 = vrot.slane %v31, 1
    %v59 = vrot.slane %v32, 1
    %v60 = vrot.slane %v33, 1
    %v61 = vrot.slane %v34, 1
    %vm62 = vcmp.lt.s32.totalorder %v36, 7
    %v63 = vsel %vm62, %v60, %v61
    %v64 = vsel %vm62, %v59, %v60
    %v65 = vsel %vm62, %v58, %v59
    %v66 = vsel %vm62, %v61, %v58
    %v67 = vrot.slane %v23, 1
    %v68 = vrot.slane %v24, 1
    %v69 = vrot.slane %v25, 1
    %v70 = vrot.slane %v26, 1
    %v71 = vsel %vm62, %v69, %v70
    %v72 = vsel %vm62, %v68, %v69
    %v73 = vsel %vm62, %v67, %v68
    %v74 = vsel %vm62, %v70, %v67
    %v75 = vadd.s32 %v41, 1
    %vm76 = vcmp.lt.s32.totalorder %v75, 128
    %v77 = vadd.s32 %v36, 1
    %v78 = vadd.s32 %v37, 1
    %v79 = vadd.s32 %v38, 1
    %v80 = vadd.s32 %v39, 1
    %vm81 = vcmp.lt.s32.totalorder %v77, 32
    %vm82 = vcmp.lt.s32.totalorder %v78, 32
    %vm83 = vcmp.lt.s32.totalorder %v79, 32
    %vm84 = vcmp.lt.s32.totalorder %v80, 32
    %v85 = vsub.f32 %v43, %v31
    %v86 = vsub.f32 %v45, %v32
    %v87 = vsub.f32 %v47, %v33
    %v88 = vsub.f32 %v49, %v34
    %v89 = vand.u32 2147483647, %v85
    %v90 = vand.u32 2147483647, %v86
    %v91 = vand.u32 2147483647, %v87
    %v92 = vand.u32 2147483647, %v88
    %v93 = vmul.f32 %v23, %v51
    %v94 = vmul.f32 %v24, %v53
    %v95 = vmul.f32 %v25, %v55
    %v96 = vmul.f32 %v26, %v57
    %v97 = vmul.f32 %v89, %v93
    %v98 = vmul.f32 %v90, %v94
    %v99 = vmul.f32 %v91, %v95
    %v100 = vmul.f32 %v92, %v96
    %v101 = vsub.f32 %v65, %v31
    %v102 = vsub.f32 %v64, %v32
    %v103 = vsub.f32 %v63, %v33
    %v104 = vsub.f32 %v66, %v34
    %v105 = vand.u32 2147483647, %v101
    %v106 = vand.u32 2147483647, %v102
    %v107 = vand.u32 2147483647, %v103
    %v108 = vand.u32 2147483647, %v104
    %v109 = vmul.f32 %v23, %v73
    %v110 = vmul.f32 %v24, %v72
    %v111 = vmul.f32 %v25, %v71
    %v112 = vmul.f32 %v26, %v74
    %v113 = vmul.f32 %v105, %v109
    %v114 = vmul.f32 %v106, %v110
    %v115 = vmul.f32 %v107, %v111
    %v116 = vmul.f32 %v108, %v112
    %v117 = vsel %vm76, %v97, 0.0
    %v118 = vsel %vm76, %v98, 0.0
    %v119 = vsel %vm76, %v99, 0.0
    %v120 = vsel %vm76, %v100, 0.0
    %v121 = vsel %vm81, %v113, 0.0
    %v122 = vsel %vm82, %v114, 0.0
    %v123 = vsel %vm83, %v115, 0.0
    %v124 = vsel %vm84, %v116, 0.0
    %v125 = vadd.f32 %v117, %v121
    %v126 = vadd.f32 %v118, %v122
    %v127 = vadd.f32 %v119, %v123
    %v128 = vadd.f32 %v120, %v124
    %v129 = vadd.f32 %v125, %v126
    %v130 = vadd.f32 %v129, %v127
    %v131 = vadd.f32 %v130, %v128
    %132 = vadd.xlane.f32.xlu0 %v131
    %v133 = vpop.xlane.xlu0 %132
    %v134 = vrot.slane %v133, 4
    %v135 = vadd.f32 %v133, %v134
    %v136 = vrot.slane %v135, 2
    %v137 = vadd.f32 %v135, %v136
    %v138 = vrot.slane %v137, 1
    %v139 = vadd.f32 %v137, %v138
    %s140 = vtos %v139
    %s141 = scalar_lea.smem [#allocation2], 0
    %142 = sst [smem:[%s141]] %s140
    %v143 = vadd.f32 %v23, %v24
    %v144 = vadd.f32 %v143, %v25
    %v145 = vadd.f32 %v144, %v26
    %146 = vadd.xlane.f32.xlu0 %v145
    %v147 = vpop.xlane.xlu0 %146
    %v148 = vrot.slane %v147, 4
    %v149 = vadd.f32 %v147, %v148
    %v150 = vrot.slane %v149, 2
    %v151 = vadd.f32 %v149, %v150
    %v152 = vrot.slane %v151, 1
    %v153 = vadd.f32 %v151, %v152
    %s154 = vtos %v153
    %s155 = scalar_lea.smem [#allocation2], 1
    %156 = sst [smem:[%s155]] %s154
    %v157 = vand.u32 %v36, 1
    %v158 = vand.u32 %v37, 1
    %v159 = vand.u32 %v38, 1
    %v160 = vand.u32 %v39, 1
    %vm161 = vcmp.eq.s32.totalorder %v157, 0
    %vm162 = vcmp.eq.s32.totalorder %v158, 0
    %vm163 = vcmp.eq.s32.totalorder %v159, 0
    %vm164 = vcmp.eq.s32.totalorder %v160, 0
    %v165 = vand.u32 %v41, 1
    %vm166 = vcmp.eq.s32.totalorder %v165, 0
    %vm167 = vmand %vm161, %vm166
    %vm168 = vmand %vm162, %vm166
    %vm169 = vmand %vm163, %vm166
    %vm170 = vmand %vm164, %vm166
    %171 = vrot.lane.b32.xlu0 %v31, 126
    %v172 = vpop.permute.xlu0 %171
    %173 = vrot.lane.b32.xlu0 %v32, 126
    %v174 = vpop.permute.xlu0 %173
    %175 = vrot.lane.b32.xlu0 %v33, 126
    %v176 = vpop.permute.xlu0 %175
    %177 = vrot.lane.b32.xlu0 %v34, 126
    %v178 = vpop.permute.xlu0 %177
    %179 = vrot.lane.b32.xlu0 %v23, 126
    %v180 = vpop.permute.xlu0 %179
    %181 = vrot.lane.b32.xlu0 %v24, 126
    %v182 = vpop.permute.xlu0 %181
    %183 = vrot.lane.b32.xlu0 %v25, 126
    %v184 = vpop.permute.xlu0 %183
    %185 = vrot.lane.b32.xlu0 %v26, 126
    %v186 = vpop.permute.xlu0 %185
    %v187 = vrot.slane %v31, 2
    %v188 = vrot.slane %v32, 2
    %v189 = vrot.slane %v33, 2
    %v190 = vrot.slane %v34, 2
    %vm191 = vcmp.lt.s32.totalorder %v36, 6
    %v192 = vsel %vm191, %v189, %v190
    %v193 = vsel %vm191, %v188, %v189
    %v194 = vsel %vm191, %v187, %v188
    %v195 = vsel %vm191, %v190, %v187
    %v196 = vrot.slane %v23, 2
    %v197 = vrot.slane %v24, 2
    %v198 = vrot.slane %v25, 2
    %v199 = vrot.slane %v26, 2
    %v200 = vsel %vm191, %v198, %v199
    %v201 = vsel %vm191, %v197, %v198
    %v202 = vsel %vm191, %v196, %v197
    %v203 = vsel %vm191, %v199, %v196
    %v204 = vadd.s32 %v41, 2
    %vm205 = vcmp.lt.s32.totalorder %v204, 128
    %vm206 = vmand %vm167, %vm205
    %vm207 = vmand %vm168, %vm205
    %vm208 = vmand %vm169, %vm205
    %vm209 = vmand %vm170, %vm205
    %v210 = vadd.s32 %v36, 2
    %v211 = vadd.s32 %v37, 2
    %v212 = vadd.s32 %v38, 2
    %v213 = vadd.s32 %v39, 2
    %vm214 = vcmp.lt.s32.totalorder %v210, 32
    %vm215 = vcmp.lt.s32.totalorder %v211, 32
    %vm216 = vcmp.lt.s32.totalorder %v212, 32
    %vm217 = vcmp.lt.s32.totalorder %v213, 32
    %vm218 = vmand %vm167, %vm214
    %vm219 = vmand %vm168, %vm215
    %vm220 = vmand %vm169, %vm216
    %vm221 = vmand %vm170, %vm217
    %v222 = vsub.f32 %v172, %v31
    %v223 = vsub.f32 %v174, %v32
    %v224 = vsub.f32 %v176, %v33
    %v225 = vsub.f32 %v178, %v34
    %v226 = vand.u32 2147483647, %v222
    %v227 = vand.u32 2147483647, %v223
    %v228 = vand.u32 2147483647, %v224
    %v229 = vand.u32 2147483647, %v225
    %v230 = vmul.f32 %v23, %v180
    %v231 = vmul.f32 %v24, %v182
    %v232 = vmul.f32 %v25, %v184
    %v233 = vmul.f32 %v26, %v186
    %v234 = vmul.f32 %v226, %v230
    %v235 = vmul.f32 %v227, %v231
    %v236 = vmul.f32 %v228, %v232
    %v237 = vmul.f32 %v229, %v233
    %v238 = vsub.f32 %v194, %v31
    %v239 = vsub.f32 %v193, %v32
    %v240 = vsub.f32 %v192, %v33
    %v241 = vsub.f32 %v195, %v34
    %v242 = vand.u32 2147483647, %v238
    %v243 = vand.u32 2147483647, %v239
    %v244 = vand.u32 2147483647, %v240
    %v245 = vand.u32 2147483647, %v241
    %v246 = vmul.f32 %v23, %v202
    %v247 = vmul.f32 %v24, %v201
    %v248 = vmul.f32 %v25, %v200
    %v249 = vmul.f32 %v26, %v203
    %v250 = vmul.f32 %v242, %v246
    %v251 = vmul.f32 %v243, %v247
    %v252 = vmul.f32 %v244, %v248
    %v253 = vmul.f32 %v245, %v249
    %v254 = vsel %vm206, %v234, 0.0
    %v255 = vsel %vm207, %v235, 0.0
    %v256 = vsel %vm208, %v236, 0.0
    %v257 = vsel %vm209, %v237, 0.0
    %v258 = vsel %vm218, %v250, 0.0
    %v259 = vsel %vm219, %v251, 0.0
    %v260 = vsel %vm220, %v252, 0.0
    %v261 = vsel %vm221, %v253, 0.0
    %v262 = vadd.f32 %v254, %v258
    %v263 = vadd.f32 %v255, %v259
    %v264 = vadd.f32 %v256, %v260
    %v265 = vadd.f32 %v257, %v261
    %v266 = vadd.f32 %v262, %v263
    %v267 = vadd.f32 %v266, %v264
    %v268 = vadd.f32 %v267, %v265
    %269 = vadd.xlane.f32.xlu0 %v268
    %v270 = vpop.xlane.xlu0 %269
    %v271 = vrot.slane %v270, 4
    %v272 = vadd.f32 %v270, %v271
    %v273 = vrot.slane %v272, 2
    %v274 = vadd.f32 %v272, %v273
    %v275 = vrot.slane %v274, 1
    %v276 = vadd.f32 %v274, %v275
    %s277 = vtos %v276
    %s278 = scalar_lea.smem [#allocation2], 128
    %279 = sst [smem:[%s278]] %s277
    %v280 = vsel %vm167, %v23, 0.0
    %v281 = vsel %vm168, %v24, 0.0
    %v282 = vsel %vm169, %v25, 0.0
    %v283 = vsel %vm170, %v26, 0.0
    %v284 = vadd.f32 %v280, %v281
    %v285 = vadd.f32 %v284, %v282
    %v286 = vadd.f32 %v285, %v283
    %287 = vadd.xlane.f32.xlu0 %v286
    %v288 = vpop.xlane.xlu0 %287
    %v289 = vrot.slane %v288, 4
    %v290 = vadd.f32 %v288, %v289
    %v291 = vrot.slane %v290, 2
    %v292 = vadd.f32 %v290, %v291
    %v293 = vrot.slane %v292, 1
    %v294 = vadd.f32 %v292, %v293
    %s295 = vtos %v294
    %s296 = scalar_lea.smem [#allocation2], 129
    %297 = sst [smem:[%s296]] %s295
    %v298 = vand.u32 %v36, 3
    %v299 = vand.u32 %v37, 3
    %v300 = vand.u32 %v38, 3
    %v301 = vand.u32 %v39, 3
    %vm302 = vcmp.eq.s32.totalorder %v298, 0
    %vm303 = vcmp.eq.s32.totalorder %v299, 0
    %vm304 = vcmp.eq.s32.totalorder %v300, 0
    %vm305 = vcmp.eq.s32.totalorder %v301, 0
    %v306 = vand.u32 %v41, 3
    %vm307 = vcmp.eq.s32.totalorder %v306, 0
    %vm308 = vmand %vm302, %vm307
    %vm309 = vmand %vm303, %vm307
    %vm310 = vmand %vm304, %vm307
    %vm311 = vmand %vm305, %vm307
    %312 = vrot.lane.b32.xlu0 %v31, 124
    %v313 = vpop.permute.xlu0 %312
    %314 = vrot.lane.b32.xlu0 %v32, 124
    %v315 = vpop.permute.xlu0 %314
    %316 = vrot.lane.b32.xlu0 %v33, 124
    %v317 = vpop.permute.xlu0 %316
    %318 = vrot.lane.b32.xlu0 %v34, 124
    %v319 = vpop.permute.xlu0 %318
    %320 = vrot.lane.b32.xlu0 %v23, 124
    %v321 = vpop.permute.xlu0 %320
    %322 = vrot.lane.b32.xlu0 %v24, 124
    %v323 = vpop.permute.xlu0 %322
    %324 = vrot.lane.b32.xlu0 %v25, 124
    %v325 = vpop.permute.xlu0 %324
    %326 = vrot.lane.b32.xlu0 %v26, 124
    %v327 = vpop.permute.xlu0 %326
    %v328 = vrot.slane %v31, 4
    %v329 = vrot.slane %v32, 4
    %v330 = vrot.slane %v33, 4
    %v331 = vrot.slane %v34, 4
    %vm332 = vcmp.lt.s32.totalorder %v36, 4
    %v333 = vsel %vm332, %v330, %v331
    %v334 = vsel %vm332, %v329, %v330
    %v335 = vsel %vm332, %v328, %v329
    %v336 = vsel %vm332, %v331, %v328
    %v337 = vrot.slane %v23, 4
    %v338 = vrot.slane %v24, 4
    %v339 = vrot.slane %v25, 4
    %v340 = vrot.slane %v26, 4
    %v341 = vsel %vm332, %v339, %v340
    %v342 = vsel %vm332, %v338, %v339
    %v343 = vsel %vm332, %v337, %v338
    %v344 = vsel %vm332, %v340, %v337
    %v345 = vadd.s32 %v41, 4
    %vm346 = vcmp.lt.s32.totalorder %v345, 128
    %vm347 = vmand %vm308, %vm346
    %vm348 = vmand %vm309, %vm346
    %vm349 = vmand %vm310, %vm346
    %vm350 = vmand %vm311, %vm346
    %v351 = vadd.s32 %v36, 4
    %v352 = vadd.s32 %v37, 4
    %v353 = vadd.s32 %v38, 4
    %v354 = vadd.s32 %v39, 4
    %vm355 = vcmp.lt.s32.totalorder %v351, 32
    %vm356 = vcmp.lt.s32.totalorder %v352, 32
    %vm357 = vcmp.lt.s32.totalorder %v353, 32
    %vm358 = vcmp.lt.s32.totalorder %v354, 32
    %vm359 = vmand %vm308, %vm355
    %vm360 = vmand %vm309, %vm356
    %vm361 = vmand %vm310, %vm357
    %vm362 = vmand %vm311, %vm358
    %v363 = vsub.f32 %v313, %v31
    %v364 = vsub.f32 %v315, %v32
    %v365 = vsub.f32 %v317, %v33
    %v366 = vsub.f32 %v319, %v34
    %v367 = vand.u32 2147483647, %v363
    %v368 = vand.u32 2147483647, %v364
    %v369 = vand.u32 2147483647, %v365
    %v370 = vand.u32 2147483647, %v366
    %v371 = vmul.f32 %v23, %v321
    %v372 = vmul.f32 %v24, %v323
    %v373 = vmul.f32 %v25, %v325
    %v374 = vmul.f32 %v26, %v327
    %v375 = vmul.f32 %v367, %v371
    %v376 = vmul.f32 %v368, %v372
    %v377 = vmul.f32 %v369, %v373
    %v378 = vmul.f32 %v370, %v374
    %v379 = vsub.f32 %v335, %v31
    %v380 = vsub.f32 %v334, %v32
    %v381 = vsub.f32 %v333, %v33
    %v382 = vsub.f32 %v336, %v34
    %v383 = vand.u32 2147483647, %v379
    %v384 = vand.u32 2147483647, %v380
    %v385 = vand.u32 2147483647, %v381
    %v386 = vand.u32 2147483647, %v382
    %v387 = vmul.f32 %v23, %v343
    %v388 = vmul.f32 %v24, %v342
    %v389 = vmul.f32 %v25, %v341
    %v390 = vmul.f32 %v26, %v344
    %v391 = vmul.f32 %v383, %v387
    %v392 = vmul.f32 %v384, %v388
    %v393 = vmul.f32 %v385, %v389
    %v394 = vmul.f32 %v386, %v390
    %v395 = vsel %vm347, %v375, 0.0
    %v396 = vsel %vm348, %v376, 0.0
    %v397 = vsel %vm349, %v377, 0.0
    %v398 = vsel %vm350, %v378, 0.0
    %v399 = vsel %vm359, %v391, 0.0
    %v400 = vsel %vm360, %v392, 0.0
    %v401 = vsel %vm361, %v393, 0.0
    %v402 = vsel %vm362, %v394, 0.0
    %v403 = vadd.f32 %v395, %v399
    %v404 = vadd.f32 %v396, %v400
    %v405 = vadd.f32 %v397, %v401
    %v406 = vadd.f32 %v398, %v402
    %v407 = vadd.f32 %v403, %v404
    %v408 = vadd.f32 %v407, %v405
    %v409 = vadd.f32 %v408, %v406
    %410 = vadd.xlane.f32.xlu0 %v409
    %v411 = vpop.xlane.xlu0 %410
    %v412 = vrot.slane %v411, 4
    %v413 = vadd.f32 %v411, %v412
    %v414 = vrot.slane %v413, 2
    %v415 = vadd.f32 %v413, %v414
    %v416 = vrot.slane %v415, 1
    %v417 = vadd.f32 %v415, %v416
    %s418 = vtos %v417
    %s419 = scalar_lea.smem [#allocation2], 256
    %420 = sst [smem:[%s419]] %s418
    %v421 = vsel %vm308, %v23, 0.0
    %v422 = vsel %vm309, %v24, 0.0
    %v423 = vsel %vm310, %v25, 0.0
    %v424 = vsel %vm311, %v26, 0.0
    %v425 = vadd.f32 %v421, %v422
    %v426 = vadd.f32 %v425, %v423
    %v427 = vadd.f32 %v426, %v424
    %428 = vadd.xlane.f32.xlu0 %v427
    %v429 = vpop.xlane.xlu0 %428
    %v430 = vrot.slane %v429, 4
    %v431 = vadd.f32 %v429, %v430
    %v432 = vrot.slane %v431, 2
    %v433 = vadd.f32 %v431, %v432
    %v434 = vrot.slane %v433, 1
    %v435 = vadd.f32 %v433, %v434
    %s436 = vtos %v435
    %s437 = scalar_lea.smem [#allocation2], 257
    %438 = sst [smem:[%s437]] %s436
    %v439 = vand.u32 %v36, 7
    %v440 = vand.u32 %v37, 7
    %v441 = vand.u32 %v38, 7
    %v442 = vand.u32 %v39, 7
    %vm443 = vcmp.eq.s32.totalorder %v439, 0
    %vm444 = vcmp.eq.s32.totalorder %v440, 0
    %vm445 = vcmp.eq.s32.totalorder %v441, 0
    %vm446 = vcmp.eq.s32.totalorder %v442, 0
    %v447 = vand.u32 %v41, 7
    %vm448 = vcmp.eq.s32.totalorder %v447, 0
    %vm449 = vmand %vm443, %vm448
    %vm450 = vmand %vm444, %vm448
    %vm451 = vmand %vm445, %vm448
    %vm452 = vmand %vm446, %vm448
    %453 = vrot.lane.b32.xlu0 %v31, 120
    %v454 = vpop.permute.xlu0 %453
    %455 = vrot.lane.b32.xlu0 %v32, 120
    %v456 = vpop.permute.xlu0 %455
    %457 = vrot.lane.b32.xlu0 %v33, 120
    %v458 = vpop.permute.xlu0 %457
    %459 = vrot.lane.b32.xlu0 %v34, 120
    %v460 = vpop.permute.xlu0 %459
    %461 = vrot.lane.b32.xlu0 %v23, 120
    %v462 = vpop.permute.xlu0 %461
    %463 = vrot.lane.b32.xlu0 %v24, 120
    %v464 = vpop.permute.xlu0 %463
    %465 = vrot.lane.b32.xlu0 %v25, 120
    %v466 = vpop.permute.xlu0 %465
    %467 = vrot.lane.b32.xlu0 %v26, 120
    %v468 = vpop.permute.xlu0 %467
    %v469 = vadd.s32 %v41, 8
    %vm470 = vcmp.lt.s32.totalorder %v469, 128
    %vm471 = vmand %vm449, %vm470
    %vm472 = vmand %vm450, %vm470
    %vm473 = vmand %vm451, %vm470
    %vm474 = vmand %vm452, %vm470
    %v475 = vadd.s32 %v37, 8
    %v476 = vadd.s32 %v38, 8
    %v477 = vadd.s32 %v39, 8
    %vm478 = vcmp.lt.s32.totalorder %v37, 32
    %vm479 = vcmp.lt.s32.totalorder %v475, 32
    %vm480 = vcmp.lt.s32.totalorder %v476, 32
    %vm481 = vcmp.lt.s32.totalorder %v477, 32
    %vm482 = vmand %vm449, %vm478
    %vm483 = vmand %vm450, %vm479
    %vm484 = vmand %vm451, %vm480
    %vm485 = vmand %vm452, %vm481
    %v486 = vsub.f32 %v454, %v31
    %v487 = vsub.f32 %v456, %v32
    %v488 = vsub.f32 %v458, %v33
    %v489 = vsub.f32 %v460, %v34
    %v490 = vand.u32 2147483647, %v486
    %v491 = vand.u32 2147483647, %v487
    %v492 = vand.u32 2147483647, %v488
    %v493 = vand.u32 2147483647, %v489
    %v494 = vmul.f32 %v23, %v462
    %v495 = vmul.f32 %v24, %v464
    %v496 = vmul.f32 %v25, %v466
    %v497 = vmul.f32 %v26, %v468
    %v498 = vmul.f32 %v490, %v494
    %v499 = vmul.f32 %v491, %v495
    %v500 = vmul.f32 %v492, %v496
    %v501 = vmul.f32 %v493, %v497
    %v502 = vsub.f32 %v32, %v31
    %v503 = vsub.f32 %v33, %v32
    %v504 = vsub.f32 %v34, %v33
    %v505 = vsub.f32 %v31, %v34
    %v506 = vand.u32 2147483647, %v502
    %v507 = vand.u32 2147483647, %v503
    %v508 = vand.u32 2147483647, %v504
    %v509 = vand.u32 2147483647, %v505
    %v510 = vmul.f32 %v23, %v24
    %v511 = vmul.f32 %v24, %v25
    %v512 = vmul.f32 %v25, %v26
    %v513 = vmul.f32 %v26, %v23
    %v514 = vmul.f32 %v506, %v510
    %v515 = vmul.f32 %v507, %v511
    %v516 = vmul.f32 %v508, %v512
    %v517 = vmul.f32 %v509, %v513
    %v518 = vsel %vm471, %v498, 0.0
    %v519 = vsel %vm472, %v499, 0.0
    %v520 = vsel %vm473, %v500, 0.0
    %v521 = vsel %vm474, %v501, 0.0
    %v522 = vsel %vm482, %v514, 0.0
    %v523 = vsel %vm483, %v515, 0.0
    %v524 = vsel %vm484, %v516, 0.0
    %v525 = vsel %vm485, %v517, 0.0
    %v526 = vadd.f32 %v518, %v522
    %v527 = vadd.f32 %v519, %v523
    %v528 = vadd.f32 %v520, %v524
    %v529 = vadd.f32 %v521, %v525
    %v530 = vadd.f32 %v526, %v527
    %v531 = vadd.f32 %v530, %v528
    %v532 = vadd.f32 %v531, %v529
    %533 = vadd.xlane.f32.xlu0 %v532
    %v534 = vpop.xlane.xlu0 %533
    %v535 = vrot.slane %v534, 4
    %v536 = vadd.f32 %v534, %v535
    %v537 = vrot.slane %v536, 2
    %v538 = vadd.f32 %v536, %v537
    %v539 = vrot.slane %v538, 1
    %v540 = vadd.f32 %v538, %v539
    %s541 = vtos %v540
    %s542 = scalar_lea.smem [#allocation2], 384
    %543 = sst [smem:[%s542]] %s541
    %v544 = vsel %vm449, %v23, 0.0
    %v545 = vsel %vm450, %v24, 0.0
    %v546 = vsel %vm451, %v25, 0.0
    %v547 = vsel %vm452, %v26, 0.0
    %v548 = vadd.f32 %v544, %v545
    %v549 = vadd.f32 %v548, %v546
    %v550 = vadd.f32 %v549, %v547
    %551 = vadd.xlane.f32.xlu0 %v550
    %v552 = vpop.xlane.xlu0 %551
    %v553 = vrot.slane %v552, 4
    %v554 = vadd.f32 %v552, %v553
    %v555 = vrot.slane %v554, 2
    %v556 = vadd.f32 %v554, %v555
    %v557 = vrot.slane %v556, 1
    %v558 = vadd.f32 %v556, %v557
    %s559 = vtos %v558
    %s560 = scalar_lea.smem [#allocation2], 385
    %561 = sst [smem:[%s560]] %s559
    // Predicated region
    $region14: #{gradient_loss.1} parent=1 // pred_check
      _
    $region15: #{gradient_loss.1} parent=1 // pred_check_branch
      %563 = sbr.rel (0) target = $region17
    $region16: #{gradient_loss.1} parent=1 // pred_region
      %s565 = ssub.s32 64, 64
      %566 = vsyncadd [#allocation3], %s565
      %s568 = sshll.u32 %s3, 4
      %s569 = int_to_ptr.vmem [resolvable:$true] %s568
      %571 = dma.smem_to_vmem [#allocation2], 64, %s569, [#allocation3]
    $region17: #{gradient_loss.1} parent=1 // pred_fallthru
      _
    // Predicated region
    $region18: #{gradient_loss.1} parent=1 // pred_check
      _
    $region19: #{gradient_loss.1} parent=1 // pred_check_branch
      %573 = sbr.rel (0) target = $region21
    $region20: #{gradient_loss.1} parent=1 // pred_region
      %574 = dma.done [#allocation3], 64
    $region21: #{gradient_loss.1} parent=1 // pred_fallthru
      _
    %575 = sfence
    %576 = vsyncpa [#allocation3], 1

</llo_original>
